<compile_context>
chip_gen: v6e
topology: v6e:2x2x1
jax: 0.10.0
libtpu: 0.0.40
codegen_flags: <defaults>
</compile_context>

<pallas_src>
from collections import OrderedDict
from functools import partial

import jax
import jax.numpy as jnp
from jax import lax
from jax.experimental import pallas as pl
from jax.experimental.pallas import tpu as pltpu


_LANES = 128
_NUM_SHARDS = 2          # "parallel" axis: both TCs on v7x, cheap serial loop on v5e/v6e
_MAX_BLOCK_ROWS = 1024   # 1024x128xf32 = 512 KiB per buffer — fits scoped VMEM on all gens


def _round_up(x, m):
    return ((x + m - 1) // m) * m


# -----------------------------------------------------------------------------
# Pallas kernel: fused sum(|pred - tgt|) and sum((pred - tgt)^2)
# -----------------------------------------------------------------------------
def _make_loss_reduce_kernel(block_rows, steps_per_shard, needs_mask, use_scratch):
    """Build the reduction kernel.

    use_scratch=False (steps_per_shard == 1): no VMEM accumulators, the reduced
    (1, 128) row-sums are stored directly to the output block.
    use_scratch=True: elementwise accumulation into block-shaped f32 scratch,
    single XLU reduce + store at the last step of each shard.
    """

    def masked_diff(nrows_ref, pred_ref, tgt_ref, logical_block):
        diff = pred_ref[...].astype(jnp.float32) - tgt_ref[...].astype(jnp.float32)
        if needs_mask:
            row_ids = logical_block * block_rows + lax.broadcasted_iota(
                jnp.int32, (block_rows, _LANES), 0)
            diff = jnp.where(row_ids < nrows_ref[0], diff, 0.0)
        return diff

    if not use_scratch:
        def kernel(nrows_ref, pred_ref, tgt_ref, l1_ref, l2_ref):
            c = pl.program_id(0)  # shard axis ("parallel"); reduction axis has 1 step
            diff = masked_diff(nrows_ref, pred_ref, tgt_ref, c)
            l1_ref[...] = jnp.sum(jnp.abs(diff), axis=0, keepdims=True)
            l2_ref[...] = jnp.sum(diff * diff, axis=0, keepdims=True)
        return kernel

    def kernel(nrows_ref, pred_ref, tgt_ref, l1_ref, l2_ref, acc_l1, acc_l2):
        c = pl.program_id(0)   # shard axis ("parallel")
        i = pl.program_id(1)   # reduction axis ("arbitrary")

        @pl.when(i == 0)
        def _init():
            acc_l1[...] = jnp.zeros_like(acc_l1)
            acc_l2[...] = jnp.zeros_like(acc_l2)

        diff = masked_diff(nrows_ref, pred_ref, tgt_ref, c * steps_per_shard + i)

        # Pure-VPU elementwise accumulation (no per-step XLU reduce, no (1,1) RMW).
        acc_l1[...] += jnp.abs(diff)
        acc_l2[...] += diff * diff

        @pl.when(i == steps_per_shard - 1)
        def _finalize():
            # Single cross-sublane reduce per shard; lane-dense (1, 128) store.
            l1_ref[...] = jnp.sum(acc_l1[...], axis=0, keepdims=True)
            l2_ref[...] = jnp.sum(acc_l2[...], axis=0, keepdims=True)

    return kernel


def _pallas_pixel_losses(pred, tgt):
    """Return (mean_abs_error, mean_squared_error) computed in a Pallas kernel."""
    assert pred.shape == tgt.shape, (pred.shape, tgt.shape)
    n_elem = pred.size

    flat_p = pred.reshape(-1)
    flat_t = tgt.reshape(-1)

    n_main = (n_elem // _LANES) * _LANES
    rem = n_elem - n_main

    l1_sum = jnp.float32(0.0)
    l2_sum = jnp.float32(0.0)

    if n_main > 0:
        rows = n_main // _LANES
        # Copy-free reshape in the common case (numel % 128 == 0).
        p2d = flat_p[:n_main].reshape(rows, _LANES)
        t2d = flat_t[:n_main].reshape(rows, _LANES)

        # Sublane alignment: 8 rows for 32-bit, 16 for 16-bit, 32 for 8-bit dtypes.
        itemsize = max(int(jnp.dtype(pred.dtype).itemsize), 1)
        row_align = max(8, 32 // itemsize)

        block_rows = min(_MAX_BLOCK_ROWS,
                         _round_up(pl.cdiv(rows, _NUM_SHARDS), row_align))
        steps_per_shard = pl.cdiv(rows, _NUM_SHARDS * block_rows)
        last_block = pl.cdiv(rows, block_rows) - 1
        needs_mask = (_NUM_SHARDS * steps_per_shard * block_rows) != rows
        use_scratch = steps_per_shard > 1

        def in_map(c, i, nrows_ref):
            # Clamp so fully-out-of-range logical blocks (tiny inputs) re-read
            # the last valid block; in-kernel masking zeroes their contribution.
            return (jnp.minimum(c * steps_per_shard + i, last_block), 0)

        def out_map(c, i, nrows_ref):
            return (0, c)

        kernel = _make_loss_reduce_kernel(
            block_rows, steps_per_shard, needs_mask, use_scratch)

        scratch_shapes = []
        if use_scratch:
            scratch_shapes = [
                pltpu.VMEM((block_rows, _LANES), jnp.float32),
                pltpu.VMEM((block_rows, _LANES), jnp.float32),
            ]

        l1_part, l2_part = pl.pallas_call(
            kernel,
            out_shape=(
                jax.ShapeDtypeStruct((1, _NUM_SHARDS * _LANES), jnp.float32),
                jax.ShapeDtypeStruct((1, _NUM_SHARDS * _LANES), jnp.float32),
            ),
            grid_spec=pltpu.PrefetchScalarGridSpec(
                num_scalar_prefetch=1,
                grid=(_NUM_SHARDS, steps_per_shard),
                in_specs=[
                    pl.BlockSpec((block_rows, _LANES), in_map),
                    pl.BlockSpec((block_rows, _LANES), in_map),
                ],
                out_specs=[
                    pl.BlockSpec((1, _LANES), out_map),
                    pl.BlockSpec((1, _LANES), out_map),
                ],
                scratch_shapes=scratch_shapes,
            ),
            compiler_params=pltpu.CompilerParams(
                dimension_semantics=("parallel", "arbitrary"),
            ),
        )(jnp.array([rows], dtype=jnp.int32), p2d, t2d)

        l1_sum = l1_sum + jnp.sum(l1_part)
        l2_sum = l2_sum + jnp.sum(l2_part)

    if rem > 0:
        # TODO(synk): <128-element tail is reduced in plain JAX; pulling it
        # in-kernel would require a padding copy of the whole slab, which
        # costs more than this tiny tail reduce.
        tp = flat_p[n_main:].astype(jnp.float32)
        tt = flat_t[n_main:].astype(jnp.float32)
        d = tp - tt
        l1_sum = l1_sum + jnp.sum(jnp.abs(d))
        l2_sum = l2_sum + jnp.sum(d * d)

    inv_n = jnp.float32(1.0 / n_elem)
    return l1_sum * inv_n, l2_sum * inv_n


# All shape-dependent Python branching above is static under tracing, so the
# whole loss path (pallas_call + tail + scaling) compiles to one program.
_pallas_pixel_losses_jit = jax.jit(_pallas_pixel_losses)


# -----------------------------------------------------------------------------
# Loss callables populating SetCriterion.losses (pixel losses, as in udl_vis
# image-restoration configs). Each returns a dict of named losses.
# -----------------------------------------------------------------------------
def pixel_loss(outputs, targets):
    pred = outputs["pred"]
    gt = targets["gt"]
    mae, mse = _pallas_pixel_losses_jit(pred, gt)
    return {"l1_loss": mae, "mse_loss": mse}


# -----------------------------------------------------------------------------
# SetCriterion — same control flow as the PyTorch module, in JAX.
# -----------------------------------------------------------------------------
class SetCriterion:
    def __init__(self, losses, weight_dict):
        self.weight_dict = weight_dict
        self.losses = losses
        # NOTE: kept as persistent instance state to match the original torch
        # module (stale keys from previous calls persist by design there too).
        self.loss_dicts = {}

    def forward(self, outputs, targets, *args, **kwargs):
        for k in self.losses.keys():
            loss = self.losses[k]
            if k == "loss":
                loss_dicts = loss(outputs, targets)
            else:
                loss_dicts = loss(outputs, targets, *args)
            if isinstance(loss_dicts, dict):
                self.loss_dicts.update(loss_dicts)
            else:
                self.loss_dicts.update({k: loss_dicts})
        return self.loss_dicts

    __call__ = forward

    def _parse_losses(self, losses):
        log_vars = OrderedDict()
        for loss_name, loss_value in losses.items():
            if isinstance(loss_value, jnp.ndarray):
                log_vars[loss_name] = jnp.mean(loss_value)
            elif isinstance(loss_value, list):
                log_vars[loss_name] = sum(jnp.mean(v) for v in loss_value)
            elif isinstance(loss_value, dict):
                for name, value in loss_value.items():
                    log_vars[name] = value
            else:
                raise TypeError(f"{loss_name} is not a tensor or list of tensors")
        assert "loss" not in log_vars.keys(), KeyError(
            "key: 'loss' can't be set from cfg_file."
        )
        loss = sum(v for k, v in log_vars.items() if "top" not in k)
        log_vars["loss"] = loss
        # TODO(synk): torch.distributed all_reduce has no single-host Pallas
        # equivalent; world_size == 1 semantics are kept.
        # Match .item() semantics with a SINGLE batched host sync (avoid one
        # blocking device_get per log var). In a training hot loop, prefer
        # returning the device scalars and syncing rarely/asynchronously.
        host_vals = jax.device_get(dict(log_vars))
        log_vars = OrderedDict((k, float(host_vals[k])) for k in log_vars.keys())
        return loss, log_vars


# -----------------------------------------------------------------------------
# Main
# -----------------------------------------------------------------------------
if __name__ == "__main__":
    key = jax.random.PRNGKey(0)
    k1, k2 = jax.random.split(key)

    # NCHW inputs, small shapes: batch=2, channels=4, spatial=16
    B, C, H, W = 2, 4, 16, 16
    pred = jax.random.normal(k1, (B, C, H, W), dtype=jnp.float32)
    gt = jax.random.normal(k2, (B, C, H, W), dtype=jnp.float32)

    outputs = {"pred": pred}
    targets = {"gt": gt}

    criterion = SetCriterion(
        losses={"loss": pixel_loss},
        weight_dict={"l1_loss": 1.0, "mse_loss": 1.0},
    )

    loss_dicts = criterion(outputs, targets)
    total_loss, log_vars = criterion._parse_losses(loss_dicts)
    total_loss = jax.block_until_ready(total_loss)

    # Sanity check against plain-JAX reference.
    ref_l1 = jnp.mean(jnp.abs(pred - gt))
    ref_l2 = jnp.mean((pred - gt) ** 2)
    assert abs(float(log_vars["l1_loss"]) - float(ref_l1)) < 1e-5, (
        log_vars["l1_loss"], float(ref_l1))
    assert abs(float(log_vars["mse_loss"]) - float(ref_l2)) < 1e-5, (
        log_vars["mse_loss"], float(ref_l2))

    print("KERNEL_OK")
</pallas_src>

<mosaic_0001>
module attributes {stable_mosaic.version = 11 : i64} {
  func.func @kernel(%arg0: i32, %arg1: i32, %arg2: memref<1xi32, #tpu.memory_space<smem>>, %arg3: memref<8x128xf32, #tpu.memory_space<vmem>>, %arg4: memref<8x128xf32, #tpu.memory_space<vmem>>, %arg5: memref<1x128xf32, #tpu.memory_space<vmem>>, %arg6: memref<1x128xf32, #tpu.memory_space<vmem>>) attributes {dimension_semantics = [#tpu.dimension_semantics<parallel>, #tpu.dimension_semantics<arbitrary>], iteration_bounds = array<i64: 2, 1>, scalar_prefetch = 1 : i64, scratch_operands = 0 : i64, tpu.core_type = #tpu.core_type<tc>, window_params = [{transform_indices = @transform_0, window_bounds = array<i64: 8, 128>}, {transform_indices = @transform_1, window_bounds = array<i64: 8, 128>}, {transform_indices = @transform_2, window_bounds = array<i64: 1, 128>}, {transform_indices = @transform_3, window_bounds = array<i64: 1, 128>}]} {
    %c0 = arith.constant 0 : index
    %c0_0 = arith.constant 0 : index
    %0 = vector.load %arg3[%c0, %c0_0] : memref<8x128xf32, #tpu.memory_space<vmem>>, vector<8x128xf32>
    %c0_1 = arith.constant 0 : index
    %c0_2 = arith.constant 0 : index
    %1 = vector.load %arg4[%c0_1, %c0_2] : memref<8x128xf32, #tpu.memory_space<vmem>>, vector<8x128xf32>
    %2 = arith.subf %0, %1 : vector<8x128xf32>
    %3 = math.absf %2 : vector<8x128xf32>
    %cst = arith.constant dense<0.000000e+00> : vector<128xf32>
    %4 = vector.multi_reduction <add>, %3, %cst [0] : vector<8x128xf32> to vector<128xf32>
    %5 = vector.shape_cast %4 : vector<128xf32> to vector<1x128xf32>
    %c0_3 = arith.constant 0 : index
    %c0_4 = arith.constant 0 : index
    %6 = vector.load %arg5[%c0_3, %c0_4] : memref<1x128xf32, #tpu.memory_space<vmem>>, vector<1x128xf32>
    tpu.vector_store %arg5[%c0_3, %c0_4], %5 {strides = array<i32>} : memref<1x128xf32, #tpu.memory_space<vmem>>, vector<1x128xf32>,
    %7 = arith.mulf %2, %2 : vector<8x128xf32>
    %cst_5 = arith.constant dense<0.000000e+00> : vector<128xf32>
    %8 = vector.multi_reduction <add>, %7, %cst_5 [0] : vector<8x128xf32> to vector<128xf32>
    %9 = vector.shape_cast %8 : vector<128xf32> to vector<1x128xf32>
    %c0_6 = arith.constant 0 : index
    %c0_7 = arith.constant 0 : index
    %10 = vector.load %arg6[%c0_6, %c0_7] : memref<1x128xf32, #tpu.memory_space<vmem>>, vector<1x128xf32>
    tpu.vector_store %arg6[%c0_6, %c0_7], %9 {strides = array<i32>} : memref<1x128xf32, #tpu.memory_space<vmem>>, vector<1x128xf32>,
    return
  }
  func.func @transform_0(%arg0: i32, %arg1: i32, %arg2: memref<1xi32, #tpu.memory_space<smem>>) -> (i32, i32) {
    %c1_i32 = arith.constant 1 : i32
    %0 = arith.muli %arg0, %c1_i32 : i32
    %1 = arith.addi %0, %arg1 : i32
    %c1_i32_0 = arith.constant 1 : i32
    %2 = arith.minsi %1, %c1_i32_0 : i32
    %c0_i32 = arith.constant 0 : i32
    %c0_i32_1 = arith.constant 0 : i32
    return %2, %c0_i32 : i32, i32
  }
  func.func @transform_1(%arg0: i32, %arg1: i32, %arg2: memref<1xi32, #tpu.memory_space<smem>>) -> (i32, i32) {
    %c1_i32 = arith.constant 1 : i32
    %0 = arith.muli %arg0, %c1_i32 : i32
    %1 = arith.addi %0, %arg1 : i32
    %c1_i32_0 = arith.constant 1 : i32
    %2 = arith.minsi %1, %c1_i32_0 : i32
    %c0_i32 = arith.constant 0 : i32
    %c0_i32_1 = arith.constant 0 : i32
    return %2, %c0_i32 : i32, i32
  }
  func.func @transform_2(%arg0: i32, %arg1: i32, %arg2: memref<1xi32, #tpu.memory_space<smem>>) -> (i32, i32) {
    %c0_i32 = arith.constant 0 : i32
    %c0_i32_0 = arith.constant 0 : i32
    return %c0_i32, %arg0 : i32, i32
  }
  func.func @transform_3(%arg0: i32, %arg1: i32, %arg2: memref<1xi32, #tpu.memory_space<smem>>) -> (i32, i32) {
    %c0_i32 = arith.constant 0 : i32
    %c0_i32_0 = arith.constant 0 : i32
    return %c0_i32, %arg0 : i32, i32
  }
}

</mosaic_0001>

<llo_original>
// kernel: _pallas_pixel_losses.1
$region0: #{_pallas_pixel_losses.1}
  #allocation0 [shape = 'u32[]', space=smem, size = 0x4, offset = 0x4, fixed_abs, tag = 'smem constant byte address 0x4 - core index']
  #allocation1 [shape = 'u32[144,128]{1,0:T(1,128)}', space=vmem, size = 0x12000, scoped, tag = 'internal scratch']
  #allocation2 [shape = 's32[1]{0}', space=sflag, size = 0x4, scoped, tag = 'scoped memory for _pallas_pixel_losses.1']
  #allocation3 [shape = 's32[1]{0:T(128)S(6)}', space=smem, size = 0x200, scoped, tag = 'prefetched SMEM operand 0']
  %s0 = inlined_call_operand.<no memory space> [shape: s32[1], index: 0, kind: input, shape index: {}]
  %s1 = inlined_call_operand.vmem [shape: f32[16,128], index: 1, kind: input, shape index: {}]
  %s2 = inlined_call_operand.vmem [shape: f32[16,128], index: 2, kind: input, shape index: {}]
  %s3 = inlined_call_operand.vmem [shape: f32[1,256], index: 3, kind: output, shape index: {0}]
  %s4 = inlined_call_operand.vmem [shape: f32[1,256], index: 4, kind: output, shape index: {1}]
  %5 = xla_tuple %s3, %s4
  %s6 = sld [smem:[#allocation0]]
  $region49: #{_pallas_pixel_losses.1} parent=0
    _
  %s8 = ssub.s32 1, %s6
  %s9 = scalar_select 0, %s8, %s6
  %10 = sst [smem:[#allocation3]] %s0
  loop: start=0, step=1, limit=4
  $region2: #{_pallas_pixel_losses.1} parent=0 // loop_pre_header
    _
  $region3: #{_pallas_pixel_losses.1} parent=0 // loop_header
    %s12 = sphi 0, %s16
    %p13 = scmp.ge.s32.totalorder %s12, 4
    %s19 = sphi 0, %s31
    %s20 = sphi 0, %s27
    %s21 = sphi 0, %s19
    %s22 = sphi 0, %s20
    %s23 = sphi 0, %s21
    %s24 = sphi 0, %s22
    %s40 = sphi 0, %s42
    %s43 = sphi 0, %s40
    %s44 = sphi 0, %s43
    %s60 = sphi 0, %s44
    %s72 = sphi 0, %s74
    %s75 = sphi 0, %s72
    %s76 = sphi 0, %s75
    %s92 = sphi 0, %s76
    %s98 = sphi 0, %s100
    %s101 = sphi 0, %s98
    %s102 = sphi 0, %s101
    %s118 = sphi 0, %s102
    %s124 = sphi 0, %s126
    %s127 = sphi 0, %s124
    %s128 = sphi 0, %s127
    %s144 = sphi 0, %s128
  $region4: #{_pallas_pixel_losses.1} parent=0 // loop_header_branch
    %15 = sbr.rel (%p13) target = $region8
  $region5: #{_pallas_pixel_losses.1} parent=0 // loop_body
    %s17 = ssub.s32 %s12, 1
    %s18 = ssub.s32 %s12, 2
    %s25 = sadd.s32 1, %s20
    %p26 = scmp.ge.s32.totalorder %s25, 1
    %s27 = scalar_select %p26, 0, %s25
    %s28 = sadd.s32 1, %s19
    %s29 = scalar_select %p26, %s28, %s19
    %p30 = scmp.ge.s32.totalorder %s29, 2
    %s31 = scalar_select %p30, 0, %s29
    %s32 = sadd.s32 %s19, %s20
    %p33 = scmp.lt.s32.totalorder %s32, 1
    %s34 = scalar_select %p33, %s32, 1
    %s35 = sadd.s32 %s31, %s27
    %p36 = scmp.lt.s32.totalorder %s35, 1
    %s37 = scalar_select %p36, %s35, 1
    %s38 = ssub.s32 %s34, %s37
    %p39 = scmp.eq.s32.totalorder %s38, 0
    %s41 = sadd.s32 %s40, 1
    %s42 = scalar_select %p39, %s40, %s41
    %p45 = pneg %p39
    %p46 = scmp.eq.s32.totalorder %s12, 1
    %p47 = por %p45, %p46
    %p48 = scmp.ne.s32.totalorder %s40, %s43
    %p49 = scmp.eq.s32.totalorder %s12, 0
    %p50 = por %p48, %p49
    %p51 = scmp.ne.s32.totalorder %s40, %s43
    %p52 = scmp.eq.s32.totalorder %s17, 1
    %p53 = por %p51, %p52
    %p54 = scmp.ne.s32.totalorder %s43, %s44
    %p55 = scmp.eq.s32.totalorder %s17, 0
    %p56 = por %p54, %p55
    %p57 = scmp.ne.s32.totalorder %s43, %s44
    %p58 = scmp.eq.s32.totalorder %s18, 1
    %p59 = por %p57, %p58
    %p61 = scmp.ne.s32.totalorder %s44, %s60
    %p62 = scmp.eq.s32.totalorder %s18, 0
    %p63 = por %p61, %p62
    %s64 = sadd.s32 %s19, %s20
    %p65 = scmp.lt.s32.totalorder %s64, 1
    %s66 = scalar_select %p65, %s64, 1
    %s67 = sadd.s32 %s31, %s27
    %p68 = scmp.lt.s32.totalorder %s67, 1
    %s69 = scalar_select %p68, %s67, 1
    %s70 = ssub.s32 %s66, %s69
    %p71 = scmp.eq.s32.totalorder %s70, 0
    %s73 = sadd.s32 %s72, 1
    %s74 = scalar_select %p71, %s72, %s73
    %p77 = pneg %p71
    %p78 = scmp.eq.s32.totalorder %s12, 1
    %p79 = por %p77, %p78
    %p80 = scmp.ne.s32.totalorder %s72, %s75
    %p81 = scmp.eq.s32.totalorder %s12, 0
    %p82 = por %p80, %p81
    %p83 = scmp.ne.s32.totalorder %s72, %s75
    %p84 = scmp.eq.s32.totalorder %s17, 1
    %p85 = por %p83, %p84
    %p86 = scmp.ne.s32.totalorder %s75, %s76
    %p87 = scmp.eq.s32.totalorder %s17, 0
    %p88 = por %p86, %p87
    %p89 = scmp.ne.s32.totalorder %s75, %s76
    %p90 = scmp.eq.s32.totalorder %s18, 1
    %p91 = por %p89, %p90
    %p93 = scmp.ne.s32.totalorder %s76, %s92
    %p94 = scmp.eq.s32.totalorder %s18, 0
    %p95 = por %p93, %p94
    %s96 = ssub.s32 %s19, %s31
    %p97 = scmp.eq.s32.totalorder %s96, 0
    %s99 = sadd.s32 %s98, 1
    %s100 = scalar_select %p97, %s98, %s99
    %p103 = pneg %p97
    %p104 = scmp.eq.s32.totalorder %s12, 1
    %p105 = por %p103, %p104
    %p106 = scmp.ne.s32.totalorder %s98, %s101
    %p107 = scmp.eq.s32.totalorder %s12, 0
    %p108 = por %p106, %p107
    %p109 = scmp.ne.s32.totalorder %s98, %s101
    %p110 = scmp.eq.s32.totalorder %s17, 1
    %p111 = por %p109, %p110
    %p112 = scmp.ne.s32.totalorder %s101, %s102
    %p113 = scmp.eq.s32.totalorder %s17, 0
    %p114 = por %p112, %p113
    %p115 = scmp.ne.s32.totalorder %s101, %s102
    %p116 = scmp.eq.s32.totalorder %s18, 1
    %p117 = por %p115, %p116
    %p119 = scmp.ne.s32.totalorder %s102, %s118
    %p120 = scmp.eq.s32.totalorder %s18, 0
    %p121 = por %p119, %p120
    %s122 = ssub.s32 %s19, %s31
    %p123 = scmp.eq.s32.totalorder %s122, 0
    %s125 = sadd.s32 %s124, 1
    %s126 = scalar_select %p123, %s124, %s125
    %p129 = pneg %p123
    %p130 = scmp.eq.s32.totalorder %s12, 1
    %p131 = por %p129, %p130
    %p132 = scmp.ne.s32.totalorder %s124, %s127
    %p133 = scmp.eq.s32.totalorder %s12, 0
    %p134 = por %p132, %p133
    %p135 = scmp.ne.s32.totalorder %s124, %s127
    %p136 = scmp.eq.s32.totalorder %s17, 1
    %p137 = por %p135, %p136
    %p138 = scmp.ne.s32.totalorder %s127, %s128
    %p139 = scmp.eq.s32.totalorder %s17, 0
    %p140 = por %p138, %p139
    %p141 = scmp.ne.s32.totalorder %s127, %s128
    %p142 = scmp.eq.s32.totalorder %s18, 1
    %p143 = por %p141, %p142
    %p145 = scmp.ne.s32.totalorder %s128, %s144
    %p146 = scmp.eq.s32.totalorder %s18, 0
    %p147 = por %p145, %p146
    %p148 = scmp.le.s32.totalorder 1, %s12
    %p149 = scmp.lt.s32.totalorder %s12, 3
    %p150 = pnand %p148, %p149
    %p151 = pneg %p150
    // Predicated region
    $region9: #{_pallas_pixel_losses.1} parent=5 // pred_check
      _
    $region10: #{_pallas_pixel_losses.1} parent=5 // pred_check_branch
      %153 = sbr.rel (%p150) target = $region12
    $region11: #{_pallas_pixel_losses.1} parent=5 // pred_region
      %s154 = ssub.s32 %s12, 1
    $region12: #{_pallas_pixel_losses.1} parent=5 // pred_fallthru
      _
    %p155 = scmp.lt.s32.totalorder %s12, 2
    // Predicated region
    $region13: #{_pallas_pixel_losses.1} parent=5 // pred_check
      %p156 = pneg %p155
    $region14: #{_pallas_pixel_losses.1} parent=5 // pred_check_branch
      %158 = sbr.rel (%p156) target = $region16
    $region15: #{_pallas_pixel_losses.1} parent=5 // pred_region
      // Predicated region
      $region17: #{_pallas_pixel_losses.1} parent=15 // pred_check
        %p159 = pneg %p50
      $region18: #{_pallas_pixel_losses.1} parent=15 // pred_check_branch
        %161 = sbr.rel (%p159) target = $region20
      $region19: #{_pallas_pixel_losses.1} parent=15 // pred_region
        %s162 = sadd.s32 %s19, %s20
        %p163 = scmp.lt.s32.totalorder %s162, 1
        %s164 = scalar_select %p163, %s162, 1
        %p165 = scmp.lt.s32.totalorder %s164, 1
        %s166 = scalar_select %p165, %s164, 1
        %s167 = smul.addr %s166, 8
        %s168 = scalar_lea.vmem %s1, %s167
        %s169 = sadd.s32 %s19, %s20
        %p170 = scmp.lt.s32.totalorder %s169, 1
        %s171 = scalar_select %p170, %s169, 1
      $region20: #{_pallas_pixel_losses.1} parent=15 // pred_fallthru
        _
      // Predicated region
      $region21: #{_pallas_pixel_losses.1} parent=15 // pred_check
        %p172 = pneg %p82
      $region22: #{_pallas_pixel_losses.1} parent=15 // pred_check_branch
        %174 = sbr.rel (%p172) target = $region24
      $region23: #{_pallas_pixel_losses.1} parent=15 // pred_region
        %s175 = sadd.s32 %s19, %s20
        %p176 = scmp.lt.s32.totalorder %s175, 1
        %s177 = scalar_select %p176, %s175, 1
        %p178 = scmp.lt.s32.totalorder %s177, 1
        %s179 = scalar_select %p178, %s177, 1
        %s180 = smul.addr %s179, 8
        %s181 = scalar_lea.vmem %s2, %s180
        %s182 = sadd.s32 %s19, %s20
        %p183 = scmp.lt.s32.totalorder %s182, 1
        %s184 = scalar_select %p183, %s182, 1
      $region24: #{_pallas_pixel_losses.1} parent=15 // pred_fallthru
        _
    $region16: #{_pallas_pixel_losses.1} parent=5 // pred_fallthru
      _
    %p185 = scmp.le.s32.totalorder 1, %s12
    %p186 = scmp.lt.s32.totalorder %s12, 3
    %p187 = pnand %p185, %p186
    %p188 = pneg %p187
    // Predicated region
    $region25: #{_pallas_pixel_losses.1} parent=5 // pred_check
      _
    $region26: #{_pallas_pixel_losses.1} parent=5 // pred_check_branch
      %190 = sbr.rel (%p187) target = $region28
    $region27: #{_pallas_pixel_losses.1} parent=5 // pred_region
      %s191 = ssub.s32 %s12, 1
      %s192 = sadd.s32 %s21, %s22
      %p193 = scmp.lt.s32.totalorder %s192, 1
      %s194 = scalar_select %p193, %s192, 1
      %p195 = scmp.lt.s32.totalorder %s194, 1
      %s196 = scalar_select %p195, %s194, 1
      %s197 = smul.addr %s196, 8
      %s198 = scalar_lea.vmem %s1, %s197
      %p199 = pneg %p56
      %p200 = pneg %p53
      %s201 = sadd.s32 %s21, %s22
      %p202 = scmp.lt.s32.totalorder %s201, 1
      %s203 = scalar_select %p202, %s201, 1
      %p204 = scmp.lt.s32.totalorder %s203, 1
      %s205 = scalar_select %p204, %s203, 1
      %s206 = smul.addr %s205, 8
      %s207 = scalar_lea.vmem %s2, %s206
      %p208 = pneg %p88
      %p209 = pneg %p85
      %p210 = pneg %p114
      %p211 = pneg %p111
      %p212 = scmp.lt.s32.totalorder %s21, 1
      %s213 = scalar_select %p212, %s21, 1
      %s214 = scalar_lea.vmem %s3, %s213
      %p215 = pneg %p140
      %p216 = pneg %p137
      %p217 = scmp.lt.s32.totalorder %s21, 1
      %s218 = scalar_select %p217, %s21, 1
      %s219 = scalar_lea.vmem %s4, %s218
      %s220 = sadd.s32 %s21, %s22
      %p221 = scmp.lt.s32.totalorder %s220, 1
      %s222 = scalar_select %p221, %s220, 1
      %p223 = scmp.lt.s32.totalorder %s222, 1
      %s224 = scalar_select %p223, %s222, 1
      %s225 = smul.addr %s224, 8
      %s226 = scalar_lea.vmem %s1, %s225
      %s227 = sadd.s32 %s21, %s22
      %p228 = scmp.lt.s32.totalorder %s227, 1
      %s229 = scalar_select %p228, %s227, 1
      %s230 = sadd.s32 %s21, %s22
      %p231 = scmp.lt.s32.totalorder %s230, 1
      %s232 = scalar_select %p231, %s230, 1
      %p233 = scmp.lt.s32.totalorder %s232, 1
      %s234 = scalar_select %p233, %s232, 1
      %s235 = smul.addr %s234, 8
      %s236 = scalar_lea.vmem %s2, %s235
      %s237 = sadd.s32 %s21, %s22
      %p238 = scmp.lt.s32.totalorder %s237, 1
      %s239 = scalar_select %p238, %s237, 1
      %p240 = scmp.lt.s32.totalorder %s21, 1
      %s241 = scalar_select %p240, %s21, 1
      %s242 = scalar_lea.vmem %s3, %s241
      %p243 = scmp.lt.s32.totalorder %s21, 1
      %s244 = scalar_select %p243, %s21, 1
      %s245 = scalar_lea.vmem %s4, %s244
      %v246 = vld [vmem:[%s226] sm:$0xff]
      %v247 = vld [vmem:[%s236] sm:$0xff]
      %v248 = vsub.f32 %v246, %v247
      %v249 = vand.u32 2147483647, %v248
      %v250 = vrot.slane %v249, 4
      %v251 = vadd.f32 %v249, %v250
      %v252 = vrot.slane %v251, 2
      %v253 = vadd.f32 %v251, %v252
      %v254 = vrot.slane %v253, 1
      %v255 = vadd.f32 %v253, %v254
      %256 = vst [vmem:[%s242] sm:$0x1] %v255
      %v257 = vmul.f32 %v248, %v248
      %v258 = vrot.slane %v257, 4
      %v259 = vadd.f32 %v257, %v258
      %v260 = vrot.slane %v259, 2
      %v261 = vadd.f32 %v259, %v260
      %v262 = vrot.slane %v261, 1
      %v263 = vadd.f32 %v261, %v262
      %264 = vst [vmem:[%s245] sm:$0x1] %v263
      %p265 = scmp.lt.s32.totalorder %s21, 1
      %s266 = scalar_select %p265, %s21, 1
      %s267 = scalar_lea.vmem %s3, %s266
      %p268 = scmp.lt.s32.totalorder %s21, 1
      %s269 = scalar_select %p268, %s21, 1
      %s270 = scalar_lea.vmem %s4, %s269
      // Predicated region
      $region29: #{_pallas_pixel_losses.1} parent=27 // pred_check
        %p271 = pneg %p111
      $region30: #{_pallas_pixel_losses.1} parent=27 // pred_check_branch
        %273 = sbr.rel (%p271) target = $region32
      $region31: #{_pallas_pixel_losses.1} parent=27 // pred_region
        _
      $region32: #{_pallas_pixel_losses.1} parent=27 // pred_fallthru
        _
      // Predicated region
      $region33: #{_pallas_pixel_losses.1} parent=27 // pred_check
        %p274 = pneg %p137
      $region34: #{_pallas_pixel_losses.1} parent=27 // pred_check_branch
        %276 = sbr.rel (%p274) target = $region36
      $region35: #{_pallas_pixel_losses.1} parent=27 // pred_region
        _
      $region36: #{_pallas_pixel_losses.1} parent=27 // pred_fallthru
        _
    $region28: #{_pallas_pixel_losses.1} parent=5 // pred_fallthru
      _
    %p277 = scmp.le.s32.totalorder 2, %s12
    // Predicated region
    $region37: #{_pallas_pixel_losses.1} parent=5 // pred_check
      %p278 = pneg %p277
    $region38: #{_pallas_pixel_losses.1} parent=5 // pred_check_branch
      %280 = sbr.rel (%p278) target = $region40
    $region39: #{_pallas_pixel_losses.1} parent=5 // pred_region
      %s281 = ssub.s32 %s12, 2
      // Predicated region
      $region41: #{_pallas_pixel_losses.1} parent=39 // pred_check
        %p282 = pneg %p117
      $region42: #{_pallas_pixel_losses.1} parent=39 // pred_check_branch
        %284 = sbr.rel (%p282) target = $region44
      $region43: #{_pallas_pixel_losses.1} parent=39 // pred_region
        %p285 = scmp.lt.s32.totalorder %s23, 1
        %s286 = scalar_select %p285, %s23, 1
        %s287 = scalar_lea.vmem %s3, %s286
      $region44: #{_pallas_pixel_losses.1} parent=39 // pred_fallthru
        _
      // Predicated region
      $region45: #{_pallas_pixel_losses.1} parent=39 // pred_check
        %p288 = pneg %p143
      $region46: #{_pallas_pixel_losses.1} parent=39 // pred_check_branch
        %290 = sbr.rel (%p288) target = $region48
      $region47: #{_pallas_pixel_losses.1} parent=39 // pred_region
        %p291 = scmp.lt.s32.totalorder %s23, 1
        %s292 = scalar_select %p291, %s23, 1
        %s293 = scalar_lea.vmem %s4, %s292
      $region48: #{_pallas_pixel_losses.1} parent=39 // pred_fallthru
        _
    $region40: #{_pallas_pixel_losses.1} parent=5 // pred_fallthru
      _
  $region6: #{_pallas_pixel_losses.1} parent=0 // loop_footer
    %s16 = sadd.s32 1, %s12
  $region7: #{_pallas_pixel_losses.1} parent=0 // loop_footer_branch
    %11 = sbr.rel target = $region3
  $region8: #{_pallas_pixel_losses.1} parent=0 // loop_exit
    _

</llo_original>
